<compile_context>
chip_gen: v6e
topology: v6e:2x2x1
jax: 0.10.0
libtpu: 0.0.40
codegen_flags: <defaults>
</compile_context>

<pallas_src>
import functools

import jax
import jax.numpy as jnp
from jax.experimental import pallas as pl
from jax.experimental.pallas import tpu as pltpu

HIDDEN = 100       # PyTorch hidden1 == hidden2 == 100
HIDDEN_PAD = 128   # padded to the 128-lane vreg width (zero pads -> exact)
MAX_TILE_B = 2048  # lane-axis batch tile cap; ~2.5 MiB/step VMEM at 2048 (f32)


def st_kernel(x_ref, w1_ref, b1_ref, w2_ref, b2_ref, w3_ref, b3_ref, o_ref):
    # Transposed dataflow: batch on the 128-lane axis, features on sublanes.
    x = x_ref[...]                            # (num_ins, TILE_B)
    w1 = w1_ref[...]                          # (HIDDEN_PAD, num_ins)
    num_ins = x.shape[0]                      # static at trace time

    # Layer 1: K == num_ins (tiny, 2) -> VPU broadcast FMAs (outer products).
    h1 = b1_ref[...]                          # (HIDDEN_PAD, 1), broadcasts over lanes
    for k in range(num_ins):                  # static unroll
        h1 = h1 + w1[:, k:k + 1] * x[k:k + 1, :]
    h1 = jnp.maximum(h1, 0.0)                 # (HIDDEN_PAD, TILE_B)

    # Layer 2: (128,128) @ (128,TILE_B) on the MXU, f32 accumulate.
    h2 = jnp.dot(w2_ref[...], h1, preferred_element_type=jnp.float32) + b2_ref[...]
    h2 = jnp.maximum(h2, 0.0)                 # (HIDDEN_PAD, TILE_B)

    # Layer 3: (num_outs,128) @ (128,TILE_B). No final activation (matches spec).
    o_ref[...] = (
        jnp.dot(w3_ref[...], h2, preferred_element_type=jnp.float32) + b3_ref[...]
    )


def _round_up(n, m):
    return ((n + m - 1) // m) * m


def _pad_params(params):
    """Zero-pad the hidden dimension 100 -> 128 and reshape biases to column
    vectors. Exact: padded units have zero in-weights, zero bias, ReLU(0)=0,
    and zero out-weights."""
    w1, b1, w2, b2, w3, b3 = params           # PyTorch layout: W (out, in), b (out,)
    hp = HIDDEN_PAD - w1.shape[0]
    w1p = jnp.pad(w1, ((0, hp), (0, 0)))                      # (128, num_ins)
    b1p = jnp.pad(b1, ((0, hp),))[:, None]                    # (128, 1)
    w2p = jnp.pad(w2, ((0, hp), (0, hp)))                     # (128, 128)
    b2p = jnp.pad(b2, ((0, hp),))[:, None]                    # (128, 1)
    w3p = jnp.pad(w3, ((0, 0), (0, hp)))                      # (num_outs, 128)
    b3p = b3[:, None]                                         # (num_outs, 1)
    return w1p, b1p, w2p, b2p, w3p, b3p


@functools.partial(jax.jit, static_argnames=("max_tile_b",))
def st_forward(x, params, *, max_tile_b=MAX_TILE_B):
    """Batched STNetwork forward. x: (B, num_ins) float32 -> (B, num_outs)."""
    w1, b1, w2, b2, w3, b3 = _pad_params(params)
    B, num_ins = x.shape
    num_outs = w3.shape[0]

    # Pick the tile COUNT first (bounds batch padding), then derive tile_b as a
    # multiple of 128 (batch is the lane axis). Force >= 2 (even) grid steps so
    # the "parallel" axis can shard across v7x's two TensorCores.
    num_tiles = max(2, pl.cdiv(B, max_tile_b))
    num_tiles += num_tiles % 2
    tile_b = _round_up(pl.cdiv(B, num_tiles), 128)
    b_pad = tile_b * num_tiles

    # Lane-dense input: batch on the last (lane) axis; zero-pad extra rows.
    xt = jnp.pad(x.T, ((0, 0), (0, b_pad - B)))               # (num_ins, b_pad)

    def resident(shape):
        # Same block every grid step -> weights/biases stay VMEM-resident.
        return pl.BlockSpec(shape, lambda i: (0, 0))

    flops = 2 * b_pad * (
        num_ins * HIDDEN_PAD + HIDDEN_PAD * HIDDEN_PAD + HIDDEN_PAD * num_outs
    )
    bytes_accessed = (
        b_pad * (num_ins + num_outs) * 4
        + sum(int(p.size) * 4 for p in (w1, b1, w2, b2, w3, b3))
    )

    out_t = pl.pallas_call(
        st_kernel,
        out_shape=jax.ShapeDtypeStruct((num_outs, b_pad), jnp.float32),
        grid=(num_tiles,),
        in_specs=[
            pl.BlockSpec((num_ins, tile_b), lambda i: (0, i)),
            resident(w1.shape),
            resident(b1.shape),
            resident(w2.shape),
            resident(b2.shape),
            resident(w3.shape),
            resident(b3.shape),
        ],
        out_specs=pl.BlockSpec((num_outs, tile_b), lambda i: (0, i)),
        compiler_params=pltpu.CompilerParams(
            dimension_semantics=("parallel",),
        ),
        cost_estimate=pl.CostEstimate(
            flops=flops, transcendentals=0, bytes_accessed=bytes_accessed
        ),
    )(xt, w1, b1, w2, b2, w3, b3)

    return out_t[:, :B].T                                     # (B, num_outs)


def init_params(key, num_ins=2, num_outs=2):
    """Deterministic init mimicking nn.Linear's U(-1/sqrt(fan_in), 1/sqrt(fan_in)).
    Weights stored PyTorch-native as (out, in); biases as (out,)."""
    def linear(k, fan_in, fan_out):
        kw, kb = jax.random.split(k)
        bound = 1.0 / jnp.sqrt(float(fan_in))
        w = jax.random.uniform(kw, (fan_out, fan_in), jnp.float32, -bound, bound)
        b = jax.random.uniform(kb, (fan_out,), jnp.float32, -bound, bound)
        return w, b

    k1, k2, k3 = jax.random.split(key, 3)
    w1, b1 = linear(k1, num_ins, HIDDEN)
    w2, b2 = linear(k2, HIDDEN, HIDDEN)
    w3, b3 = linear(k3, HIDDEN, num_outs)
    return (w1, b1, w2, b2, w3, b3)


def reference_forward(x, params):
    """Pure-JAX reference (unpadded params, full-precision dots)."""
    w1, b1, w2, b2, w3, b3 = params
    hi = jax.lax.Precision.HIGHEST
    h = jnp.maximum(jnp.dot(x, w1.T, precision=hi) + b1, 0.0)
    h = jnp.maximum(jnp.dot(h, w2.T, precision=hi) + b2, 0.0)
    return jnp.dot(h, w3.T, precision=hi) + b3


if __name__ == "__main__":
    key = jax.random.PRNGKey(0)
    kx, kx2, kp = jax.random.split(key, 3)

    num_ins, num_outs = 2, 2
    params = init_params(kp, num_ins=num_ins, num_outs=num_outs)

    # Small aligned batch.
    B = 8
    x = jax.random.normal(kx, (B, num_ins), dtype=jnp.float32)
    out = jax.block_until_ready(st_forward(x, params))
    ref = reference_forward(x, params)
    assert out.shape == (B, num_outs)
    assert jnp.allclose(out, ref, atol=2e-4, rtol=2e-4), "mismatch vs reference (B=8)"

    # Ragged batch exercises the zero-padding + output slice path.
    B2 = 13
    x2 = jax.random.normal(kx2, (B2, num_ins), dtype=jnp.float32)
    out2 = jax.block_until_ready(st_forward(x2, params))
    ref2 = reference_forward(x2, params)
    assert out2.shape == (B2, num_outs)
    assert jnp.allclose(out2, ref2, atol=2e-4, rtol=2e-4), "mismatch vs reference (B=13)"

    print("KERNEL_OK")
</pallas_src>

<mosaic_0001>
module attributes {stable_mosaic.version = 11 : i64} {
  func.func @st_kernel(%arg0: i32, %arg1: memref<2x128xf32, #tpu.memory_space<vmem>>, %arg2: memref<128x2xf32, #tpu.memory_space<vmem>>, %arg3: memref<128x1xf32, #tpu.memory_space<vmem>>, %arg4: memref<128x128xf32, #tpu.memory_space<vmem>>, %arg5: memref<128x1xf32, #tpu.memory_space<vmem>>, %arg6: memref<2x128xf32, #tpu.memory_space<vmem>>, %arg7: memref<2x1xf32, #tpu.memory_space<vmem>>, %arg8: memref<2x128xf32, #tpu.memory_space<vmem>>) attributes {dimension_semantics = [#tpu.dimension_semantics<parallel>], iteration_bounds = array<i64: 2>, scalar_prefetch = 0 : i64, scratch_operands = 0 : i64, tpu.core_type = #tpu.core_type<tc>, window_params = [{transform_indices = @transform_0, window_bounds = array<i64: 2, 128>}, {pipeline_mode = #tpu.pipeline_mode<synchronous>, transform_indices = @transform_1, window_bounds = array<i64: 128, 2>}, {pipeline_mode = #tpu.pipeline_mode<synchronous>, transform_indices = @transform_2, window_bounds = array<i64: 128, 1>}, {pipeline_mode = #tpu.pipeline_mode<synchronous>, transform_indices = @transform_3, window_bounds = array<i64: 128, 128>}, {pipeline_mode = #tpu.pipeline_mode<synchronous>, transform_indices = @transform_4, window_bounds = array<i64: 128, 1>}, {pipeline_mode = #tpu.pipeline_mode<synchronous>, transform_indices = @transform_5, window_bounds = array<i64: 2, 128>}, {pipeline_mode = #tpu.pipeline_mode<synchronous>, transform_indices = @transform_6, window_bounds = array<i64: 2, 1>}, {transform_indices = @transform_7, window_bounds = array<i64: 2, 128>}]} {
    %c0 = arith.constant 0 : index
    %c0_0 = arith.constant 0 : index
    %0 = vector.load %arg1[%c0, %c0_0] : memref<2x128xf32, #tpu.memory_space<vmem>>, vector<2x128xf32>
    %c0_1 = arith.constant 0 : index
    %c0_2 = arith.constant 0 : index
    %1 = vector.load %arg2[%c0_1, %c0_2] : memref<128x2xf32, #tpu.memory_space<vmem>>, vector<128x2xf32>
    %c0_3 = arith.constant 0 : index
    %c0_4 = arith.constant 0 : index
    %2 = vector.load %arg3[%c0_3, %c0_4] : memref<128x1xf32, #tpu.memory_space<vmem>>, vector<128x1xf32>
    %3 = vector.extract_strided_slice %1 {offsets = [0, 0], sizes = [128, 1], strides = [1, 1]} : vector<128x2xf32> to vector<128x1xf32>
    %4 = vector.extract_strided_slice %0 {offsets = [0, 0], sizes = [1, 128], strides = [1, 1]} : vector<2x128xf32> to vector<1x128xf32>
    %5 = vector.broadcast %3 : vector<128x1xf32> to vector<128x128xf32>
    %6 = vector.broadcast %4 : vector<1x128xf32> to vector<128x128xf32>
    %7 = arith.mulf %5, %6 : vector<128x128xf32>
    %8 = vector.broadcast %2 : vector<128x1xf32> to vector<128x128xf32>
    %9 = arith.addf %8, %7 : vector<128x128xf32>
    %10 = vector.extract_strided_slice %1 {offsets = [0, 1], sizes = [128, 1], strides = [1, 1]} : vector<128x2xf32> to vector<128x1xf32>
    %11 = vector.extract_strided_slice %0 {offsets = [1, 0], sizes = [1, 128], strides = [1, 1]} : vector<2x128xf32> to vector<1x128xf32>
    %12 = vector.broadcast %10 : vector<128x1xf32> to vector<128x128xf32>
    %13 = vector.broadcast %11 : vector<1x128xf32> to vector<128x128xf32>
    %14 = arith.mulf %12, %13 : vector<128x128xf32>
    %15 = arith.addf %9, %14 : vector<128x128xf32>
    %cst = arith.constant 0.000000e+00 : f32
    %16 = vector.broadcast %cst : f32 to vector<128x128xf32>
    %17 = arith.maximumf %15, %16 : vector<128x128xf32>
    %c0_5 = arith.constant 0 : index
    %c0_6 = arith.constant 0 : index
    %18 = vector.load %arg4[%c0_5, %c0_6] : memref<128x128xf32, #tpu.memory_space<vmem>>, vector<128x128xf32>
    %cst_7 = arith.constant dense<0.000000e+00> : vector<128x128xf32>
    %19 = tpu.matmul %18, %17, %cst_7 {dimension_numbers = #tpu.dot_dimension_numbers<[1], [0], [0], [1], [0, 0, 1, 1], [], []>} : vector<128x128xf32>, vector<128x128xf32>, vector<128x128xf32> -> vector<128x128xf32>
    %c0_8 = arith.constant 0 : index
    %c0_9 = arith.constant 0 : index
    %20 = vector.load %arg5[%c0_8, %c0_9] : memref<128x1xf32, #tpu.memory_space<vmem>>, vector<128x1xf32>
    %21 = vector.broadcast %20 : vector<128x1xf32> to vector<128x128xf32>
    %22 = arith.addf %19, %21 : vector<128x128xf32>
    %cst_10 = arith.constant 0.000000e+00 : f32
    %23 = vector.broadcast %cst_10 : f32 to vector<128x128xf32>
    %24 = arith.maximumf %22, %23 : vector<128x128xf32>
    %c0_11 = arith.constant 0 : index
    %c0_12 = arith.constant 0 : index
    %25 = vector.load %arg6[%c0_11, %c0_12] : memref<2x128xf32, #tpu.memory_space<vmem>>, vector<2x128xf32>
    %cst_13 = arith.constant dense<0.000000e+00> : vector<2x128xf32>
    %26 = tpu.matmul %25, %24, %cst_13 {dimension_numbers = #tpu.dot_dimension_numbers<[1], [0], [0], [1], [0, 0, 1, 1], [], []>} : vector<2x128xf32>, vector<128x128xf32>, vector<2x128xf32> -> vector<2x128xf32>
    %c0_14 = arith.constant 0 : index
    %c0_15 = arith.constant 0 : index
    %27 = vector.load %arg7[%c0_14, %c0_15] : memref<2x1xf32, #tpu.memory_space<vmem>>, vector<2x1xf32>
    %28 = vector.broadcast %27 : vector<2x1xf32> to vector<2x128xf32>
    %29 = arith.addf %26, %28 : vector<2x128xf32>
    %c0_16 = arith.constant 0 : index
    %c0_17 = arith.constant 0 : index
    %30 = vector.load %arg8[%c0_16, %c0_17] : memref<2x128xf32, #tpu.memory_space<vmem>>, vector<2x128xf32>
    tpu.vector_store %arg8[%c0_16, %c0_17], %29 {strides = array<i32>} : memref<2x128xf32, #tpu.memory_space<vmem>>, vector<2x128xf32>,
    return
  }
  func.func @transform_0(%arg0: i32) -> (i32, i32) {
    %c0_i32 = arith.constant 0 : i32
    %c0_i32_0 = arith.constant 0 : i32
    return %c0_i32, %arg0 : i32, i32
  }
  func.func @transform_1(%arg0: i32) -> (i32, i32) {
    %c0_i32 = arith.constant 0 : i32
    %c0_i32_0 = arith.constant 0 : i32
    %c0_i32_1 = arith.constant 0 : i32
    return %c0_i32, %c0_i32_0 : i32, i32
  }
  func.func @transform_2(%arg0: i32) -> (i32, i32) {
    %c0_i32 = arith.constant 0 : i32
    %c0_i32_0 = arith.constant 0 : i32
    %c0_i32_1 = arith.constant 0 : i32
    return %c0_i32, %c0_i32_0 : i32, i32
  }
  func.func @transform_3(%arg0: i32) -> (i32, i32) {
    %c0_i32 = arith.constant 0 : i32
    %c0_i32_0 = arith.constant 0 : i32
    %c0_i32_1 = arith.constant 0 : i32
    return %c0_i32, %c0_i32_0 : i32, i32
  }
  func.func @transform_4(%arg0: i32) -> (i32, i32) {
    %c0_i32 = arith.constant 0 : i32
    %c0_i32_0 = arith.constant 0 : i32
    %c0_i32_1 = arith.constant 0 : i32
    return %c0_i32, %c0_i32_0 : i32, i32
  }
  func.func @transform_5(%arg0: i32) -> (i32, i32) {
    %c0_i32 = arith.constant 0 : i32
    %c0_i32_0 = arith.constant 0 : i32
    %c0_i32_1 = arith.constant 0 : i32
    return %c0_i32, %c0_i32_0 : i32, i32
  }
  func.func @transform_6(%arg0: i32) -> (i32, i32) {
    %c0_i32 = arith.constant 0 : i32
    %c0_i32_0 = arith.constant 0 : i32
    %c0_i32_1 = arith.constant 0 : i32
    return %c0_i32, %c0_i32_0 : i32, i32
  }
  func.func @transform_7(%arg0: i32) -> (i32, i32) {
    %c0_i32 = arith.constant 0 : i32
    %c0_i32_0 = arith.constant 0 : i32
    return %c0_i32, %arg0 : i32, i32
  }
}

</mosaic_0001>

<llo_original>
// kernel: st_forward.1
$region0: #{st_forward.1}
  #allocation0 [shape = 'u32[]', space=smem, size = 0x4, offset = 0x4, fixed_abs, tag = 'smem constant byte address 0x4 - core index']
  #allocation1 [shape = 'u32[144,128]{1,0:T(1,128)}', space=vmem, size = 0x12000, scoped, tag = 'internal scratch']
  %s0 = inlined_call_operand.vmem [shape: f32[2,256], index: 0, kind: input, shape index: {}]
  %s1 = inlined_call_operand.vmem [shape: f32[128,2], index: 1, kind: input, shape index: {}]
  %s2 = inlined_call_operand.vmem [shape: f32[128,1], index: 2, kind: input, shape index: {}]
  %s3 = inlined_call_operand.vmem [shape: f32[128,128], index: 3, kind: input, shape index: {}]
  %s4 = inlined_call_operand.vmem [shape: f32[128,1], index: 4, kind: input, shape index: {}]
  %s5 = inlined_call_operand.vmem [shape: f32[2,128], index: 5, kind: input, shape index: {}]
  %s6 = inlined_call_operand.vmem [shape: f32[2,1], index: 6, kind: input, shape index: {}]
  %s7 = inlined_call_operand.vmem [shape: f32[2,256], index: 7, kind: output, shape index: {}]
  %s8 = sld [smem:[#allocation0]]
  $region61: #{st_forward.1} parent=0
    _
  %s10 = ssub.s32 1, %s8
  %s11 = scalar_select 0, %s10, %s8
  loop: start=0, step=1, limit=4
  $region2: #{st_forward.1} parent=0 // loop_pre_header
    _
  $region3: #{st_forward.1} parent=0 // loop_header
    %s13 = sphi 0, %s17
    %p14 = scmp.ge.s32.totalorder %s13, 4
    %s23 = sphi 0, %s25
    %s26 = sphi 0, %s23
    %s27 = sphi 0, %s26
    %s43 = sphi 0, %s27
    %s47 = sphi 0, %s47
    %s49 = sphi 0, %s47
    %s50 = sphi 0, %s49
    %s64 = sphi 0, %s50
    %s68 = sphi 0, %s68
    %s70 = sphi 0, %s68
    %s71 = sphi 0, %s70
    %s85 = sphi 0, %s71
    %s89 = sphi 0, %s89
    %s91 = sphi 0, %s89
    %s92 = sphi 0, %s91
    %s106 = sphi 0, %s92
    %s110 = sphi 0, %s110
    %s112 = sphi 0, %s110
    %s113 = sphi 0, %s112
    %s127 = sphi 0, %s113
    %s131 = sphi 0, %s131
    %s133 = sphi 0, %s131
    %s134 = sphi 0, %s133
    %s148 = sphi 0, %s134
    %s152 = sphi 0, %s152
    %s154 = sphi 0, %s152
    %s155 = sphi 0, %s154
    %s169 = sphi 0, %s155
    %s175 = sphi 0, %s177
    %s178 = sphi 0, %s175
    %s179 = sphi 0, %s178
    %s195 = sphi 0, %s179
  $region4: #{st_forward.1} parent=0 // loop_header_branch
    %16 = sbr.rel (%p14) target = $region8
  $region5: #{st_forward.1} parent=0 // loop_body
    %s18 = ssub.s32 %s13, 1
    %s19 = ssub.s32 %s13, 2
    %s20 = sadd.s32 %s13, 1
    %s21 = ssub.s32 %s13, %s20
    %p22 = scmp.eq.s32.totalorder %s21, 0
    %s24 = sadd.s32 %s23, 1
    %s25 = scalar_select %p22, %s23, %s24
    %p28 = pneg %p22
    %p29 = scmp.eq.s32.totalorder %s13, 1
    %p30 = por %p28, %p29
    %p31 = scmp.ne.s32.totalorder %s23, %s26
    %p32 = scmp.eq.s32.totalorder %s13, 0
    %p33 = por %p31, %p32
    %p34 = scmp.ne.s32.totalorder %s23, %s26
    %p35 = scmp.eq.s32.totalorder %s18, 1
    %p36 = por %p34, %p35
    %p37 = scmp.ne.s32.totalorder %s26, %s27
    %p38 = scmp.eq.s32.totalorder %s18, 0
    %p39 = por %p37, %p38
    %p40 = scmp.ne.s32.totalorder %s26, %s27
    %p41 = scmp.eq.s32.totalorder %s19, 1
    %p42 = por %p40, %p41
    %p44 = scmp.ne.s32.totalorder %s27, %s43
    %p45 = scmp.eq.s32.totalorder %s19, 0
    %p46 = por %p44, %p45
    %s48 = sadd.s32 %s47, 1
    %p51 = scmp.eq.s32.totalorder %s13, 1
    %p52 = scmp.ne.s32.totalorder %s47, %s49
    %p53 = scmp.eq.s32.totalorder %s13, 0
    %p54 = por %p52, %p53
    %p55 = scmp.ne.s32.totalorder %s47, %s49
    %p56 = scmp.eq.s32.totalorder %s18, 1
    %p57 = por %p55, %p56
    %p58 = scmp.ne.s32.totalorder %s49, %s50
    %p59 = scmp.eq.s32.totalorder %s18, 0
    %p60 = por %p58, %p59
    %p61 = scmp.ne.s32.totalorder %s49, %s50
    %p62 = scmp.eq.s32.totalorder %s19, 1
    %p63 = por %p61, %p62
    %p65 = scmp.ne.s32.totalorder %s50, %s64
    %p66 = scmp.eq.s32.totalorder %s19, 0
    %p67 = por %p65, %p66
    %s69 = sadd.s32 %s68, 1
    %p72 = scmp.eq.s32.totalorder %s13, 1
    %p73 = scmp.ne.s32.totalorder %s68, %s70
    %p74 = scmp.eq.s32.totalorder %s13, 0
    %p75 = por %p73, %p74
    %p76 = scmp.ne.s32.totalorder %s68, %s70
    %p77 = scmp.eq.s32.totalorder %s18, 1
    %p78 = por %p76, %p77
    %p79 = scmp.ne.s32.totalorder %s70, %s71
    %p80 = scmp.eq.s32.totalorder %s18, 0
    %p81 = por %p79, %p80
    %p82 = scmp.ne.s32.totalorder %s70, %s71
    %p83 = scmp.eq.s32.totalorder %s19, 1
    %p84 = por %p82, %p83
    %p86 = scmp.ne.s32.totalorder %s71, %s85
    %p87 = scmp.eq.s32.totalorder %s19, 0
    %p88 = por %p86, %p87
    %s90 = sadd.s32 %s89, 1
    %p93 = scmp.eq.s32.totalorder %s13, 1
    %p94 = scmp.ne.s32.totalorder %s89, %s91
    %p95 = scmp.eq.s32.totalorder %s13, 0
    %p96 = por %p94, %p95
    %p97 = scmp.ne.s32.totalorder %s89, %s91
    %p98 = scmp.eq.s32.totalorder %s18, 1
    %p99 = por %p97, %p98
    %p100 = scmp.ne.s32.totalorder %s91, %s92
    %p101 = scmp.eq.s32.totalorder %s18, 0
    %p102 = por %p100, %p101
    %p103 = scmp.ne.s32.totalorder %s91, %s92
    %p104 = scmp.eq.s32.totalorder %s19, 1
    %p105 = por %p103, %p104
    %p107 = scmp.ne.s32.totalorder %s92, %s106
    %p108 = scmp.eq.s32.totalorder %s19, 0
    %p109 = por %p107, %p108
    %s111 = sadd.s32 %s110, 1
    %p114 = scmp.eq.s32.totalorder %s13, 1
    %p115 = scmp.ne.s32.totalorder %s110, %s112
    %p116 = scmp.eq.s32.totalorder %s13, 0
    %p117 = por %p115, %p116
    %p118 = scmp.ne.s32.totalorder %s110, %s112
    %p119 = scmp.eq.s32.totalorder %s18, 1
    %p120 = por %p118, %p119
    %p121 = scmp.ne.s32.totalorder %s112, %s113
    %p122 = scmp.eq.s32.totalorder %s18, 0
    %p123 = por %p121, %p122
    %p124 = scmp.ne.s32.totalorder %s112, %s113
    %p125 = scmp.eq.s32.totalorder %s19, 1
    %p126 = por %p124, %p125
    %p128 = scmp.ne.s32.totalorder %s113, %s127
    %p129 = scmp.eq.s32.totalorder %s19, 0
    %p130 = por %p128, %p129
    %s132 = sadd.s32 %s131, 1
    %p135 = scmp.eq.s32.totalorder %s13, 1
    %p136 = scmp.ne.s32.totalorder %s131, %s133
    %p137 = scmp.eq.s32.totalorder %s13, 0
    %p138 = por %p136, %p137
    %p139 = scmp.ne.s32.totalorder %s131, %s133
    %p140 = scmp.eq.s32.totalorder %s18, 1
    %p141 = por %p139, %p140
    %p142 = scmp.ne.s32.totalorder %s133, %s134
    %p143 = scmp.eq.s32.totalorder %s18, 0
    %p144 = por %p142, %p143
    %p145 = scmp.ne.s32.totalorder %s133, %s134
    %p146 = scmp.eq.s32.totalorder %s19, 1
    %p147 = por %p145, %p146
    %p149 = scmp.ne.s32.totalorder %s134, %s148
    %p150 = scmp.eq.s32.totalorder %s19, 0
    %p151 = por %p149, %p150
    %s153 = sadd.s32 %s152, 1
    %p156 = scmp.eq.s32.totalorder %s13, 1
    %p157 = scmp.ne.s32.totalorder %s152, %s154
    %p158 = scmp.eq.s32.totalorder %s13, 0
    %p159 = por %p157, %p158
    %p160 = scmp.ne.s32.totalorder %s152, %s154
    %p161 = scmp.eq.s32.totalorder %s18, 1
    %p162 = por %p160, %p161
    %p163 = scmp.ne.s32.totalorder %s154, %s155
    %p164 = scmp.eq.s32.totalorder %s18, 0
    %p165 = por %p163, %p164
    %p166 = scmp.ne.s32.totalorder %s154, %s155
    %p167 = scmp.eq.s32.totalorder %s19, 1
    %p168 = por %p166, %p167
    %p170 = scmp.ne.s32.totalorder %s155, %s169
    %p171 = scmp.eq.s32.totalorder %s19, 0
    %p172 = por %p170, %p171
    %s173 = ssub.s32 %s13, %s20
    %p174 = scmp.eq.s32.totalorder %s173, 0
    %s176 = sadd.s32 %s175, 1
    %s177 = scalar_select %p174, %s175, %s176
    %p180 = pneg %p174
    %p181 = scmp.eq.s32.totalorder %s13, 1
    %p182 = por %p180, %p181
    %p183 = scmp.ne.s32.totalorder %s175, %s178
    %p184 = scmp.eq.s32.totalorder %s13, 0
    %p185 = por %p183, %p184
    %p186 = scmp.ne.s32.totalorder %s175, %s178
    %p187 = scmp.eq.s32.totalorder %s18, 1
    %p188 = por %p186, %p187
    %p189 = scmp.ne.s32.totalorder %s178, %s179
    %p190 = scmp.eq.s32.totalorder %s18, 0
    %p191 = por %p189, %p190
    %p192 = scmp.ne.s32.totalorder %s178, %s179
    %p193 = scmp.eq.s32.totalorder %s19, 1
    %p194 = por %p192, %p193
    %p196 = scmp.ne.s32.totalorder %s179, %s195
    %p197 = scmp.eq.s32.totalorder %s19, 0
    %p198 = por %p196, %p197
    %p199 = scmp.le.s32.totalorder 1, %s13
    %p200 = scmp.lt.s32.totalorder %s13, 3
    %p201 = pnand %p199, %p200
    %p202 = pneg %p201
    // Predicated region
    $region9: #{st_forward.1} parent=5 // pred_check
      _
    $region10: #{st_forward.1} parent=5 // pred_check_branch
      %204 = sbr.rel (%p201) target = $region12
    $region11: #{st_forward.1} parent=5 // pred_region
      %s205 = ssub.s32 %s13, 1
      // Predicated region
      $region13: #{st_forward.1} parent=11 // pred_check
        %p206 = pneg %p60
      $region14: #{st_forward.1} parent=11 // pred_check_branch
        %208 = sbr.rel (%p206) target = $region16
      $region15: #{st_forward.1} parent=11 // pred_region
        _
      $region16: #{st_forward.1} parent=11 // pred_fallthru
        _
      // Predicated region
      $region17: #{st_forward.1} parent=11 // pred_check
        %p209 = pneg %p81
      $region18: #{st_forward.1} parent=11 // pred_check_branch
        %211 = sbr.rel (%p209) target = $region20
      $region19: #{st_forward.1} parent=11 // pred_region
        _
      $region20: #{st_forward.1} parent=11 // pred_fallthru
        _
      // Predicated region
      $region21: #{st_forward.1} parent=11 // pred_check
        %p212 = pneg %p102
      $region22: #{st_forward.1} parent=11 // pred_check_branch
        %214 = sbr.rel (%p212) target = $region24
      $region23: #{st_forward.1} parent=11 // pred_region
        _
      $region24: #{st_forward.1} parent=11 // pred_fallthru
        _
      // Predicated region
      $region25: #{st_forward.1} parent=11 // pred_check
        %p215 = pneg %p123
      $region26: #{st_forward.1} parent=11 // pred_check_branch
        %217 = sbr.rel (%p215) target = $region28
      $region27: #{st_forward.1} parent=11 // pred_region
        _
      $region28: #{st_forward.1} parent=11 // pred_fallthru
        _
      // Predicated region
      $region29: #{st_forward.1} parent=11 // pred_check
        %p218 = pneg %p144
      $region30: #{st_forward.1} parent=11 // pred_check_branch
        %220 = sbr.rel (%p218) target = $region32
      $region31: #{st_forward.1} parent=11 // pred_region
        _
      $region32: #{st_forward.1} parent=11 // pred_fallthru
        _
      // Predicated region
      $region33: #{st_forward.1} parent=11 // pred_check
        %p221 = pneg %p165
      $region34: #{st_forward.1} parent=11 // pred_check_branch
        %223 = sbr.rel (%p221) target = $region36
      $region35: #{st_forward.1} parent=11 // pred_region
        _
      $region36: #{st_forward.1} parent=11 // pred_fallthru
        _
    $region12: #{st_forward.1} parent=5 // pred_fallthru
      _
    %p224 = scmp.lt.s32.totalorder %s13, 2
    // Predicated region
    $region37: #{st_forward.1} parent=5 // pred_check
      %p225 = pneg %p224
    $region38: #{st_forward.1} parent=5 // pred_check_branch
      %227 = sbr.rel (%p225) target = $region40
    $region39: #{st_forward.1} parent=5 // pred_region
      // Predicated region
      $region41: #{st_forward.1} parent=39 // pred_check
        %p228 = pneg %p33
      $region42: #{st_forward.1} parent=39 // pred_check_branch
        %230 = sbr.rel (%p228) target = $region44
      $region43: #{st_forward.1} parent=39 // pred_region
        %p231 = scmp.lt.s32.totalorder %s13, 1
        %s232 = scalar_select %p231, %s13, 1
        %s233 = smul.addr %s232, 2
        %s234 = scalar_lea.vmem %s0, %s233
      $region44: #{st_forward.1} parent=39 // pred_fallthru
        _
    $region40: #{st_forward.1} parent=5 // pred_fallthru
      _
    %p235 = scmp.le.s32.totalorder 1, %s13
    %p236 = scmp.lt.s32.totalorder %s13, 3
    %p237 = pnand %p235, %p236
    %p238 = pneg %p237
    // Predicated region
    $region45: #{st_forward.1} parent=5 // pred_check
      _
    $region46: #{st_forward.1} parent=5 // pred_check_branch
      %240 = sbr.rel (%p237) target = $region48
    $region47: #{st_forward.1} parent=5 // pred_region
      %s241 = ssub.s32 %s13, 1
      %p242 = scmp.lt.s32.totalorder %s18, 1
      %s243 = scalar_select %p242, %s18, 1
      %s244 = smul.addr %s243, 2
      %s245 = scalar_lea.vmem %s0, %s244
      %p246 = pneg %p39
      %p247 = pneg %p36
      %p248 = pneg %p60
      %p249 = pneg %p57
      %p250 = pneg %p81
      %p251 = pneg %p78
      %p252 = pneg %p102
      %p253 = pneg %p99
      %p254 = pneg %p123
      %p255 = pneg %p120
      %p256 = pneg %p144
      %p257 = pneg %p141
      %p258 = pneg %p165
      %p259 = pneg %p162
      %p260 = pneg %p191
      %p261 = pneg %p188
      %p262 = scmp.lt.s32.totalorder %s18, 1
      %s263 = scalar_select %p262, %s18, 1
      %s264 = smul.addr %s263, 2
      %s265 = scalar_lea.vmem %s7, %s264
      %p266 = scmp.lt.s32.totalorder %s18, 1
      %s267 = scalar_select %p266, %s18, 1
      %s268 = smul.addr %s267, 2
      %s269 = scalar_lea.vmem %s0, %s268
      %p270 = scmp.lt.s32.totalorder %s18, 1
      %s271 = scalar_select %p270, %s18, 1
      %s272 = smul.addr %s271, 2
      %s273 = scalar_lea.vmem %s7, %s272
      %v274 = vld [vmem:[%s269] sm:$0x3]
      %v275 = vld [vmem:[%s1] sm:$0xff]
      %v276 = vld [vmem:[%s1 + $0x8] sm:$0xff]
      %v277 = vld [vmem:[%s1 + $0x10] sm:$0xff]
      %v278 = vld [vmem:[%s1 + $0x18] sm:$0xff]
      %v279 = vld [vmem:[%s1 + $0x20] sm:$0xff]
      %v280 = vld [vmem:[%s1 + $0x28] sm:$0xff]
      %v281 = vld [vmem:[%s1 + $0x30] sm:$0xff]
      %v282 = vld [vmem:[%s1 + $0x38] sm:$0xff]
      %v283 = vld [vmem:[%s1 + $0x40] sm:$0xff]
      %v284 = vld [vmem:[%s1 + $0x48] sm:$0xff]
      %v285 = vld [vmem:[%s1 + $0x50] sm:$0xff]
      %v286 = vld [vmem:[%s1 + $0x58] sm:$0xff]
      %v287 = vld [vmem:[%s1 + $0x60] sm:$0xff]
      %v288 = vld [vmem:[%s1 + $0x68] sm:$0xff]
      %v289 = vld [vmem:[%s1 + $0x70] sm:$0xff]
      %v290 = vld [vmem:[%s1 + $0x78] sm:$0xff]
      %v291 = vld [vmem:[%s2] sm:$0xff]
      %v292 = vld [vmem:[%s2 + $0x8] sm:$0xff]
      %v293 = vld [vmem:[%s2 + $0x10] sm:$0xff]
      %v294 = vld [vmem:[%s2 + $0x18] sm:$0xff]
      %v295 = vld [vmem:[%s2 + $0x20] sm:$0xff]
      %v296 = vld [vmem:[%s2 + $0x28] sm:$0xff]
      %v297 = vld [vmem:[%s2 + $0x30] sm:$0xff]
      %v298 = vld [vmem:[%s2 + $0x38] sm:$0xff]
      %v299 = vld [vmem:[%s2 + $0x40] sm:$0xff]
      %v300 = vld [vmem:[%s2 + $0x48] sm:$0xff]
      %v301 = vld [vmem:[%s2 + $0x50] sm:$0xff]
      %v302 = vld [vmem:[%s2 + $0x58] sm:$0xff]
      %v303 = vld [vmem:[%s2 + $0x60] sm:$0xff]
      %v304 = vld [vmem:[%s2 + $0x68] sm:$0xff]
      %v305 = vld [vmem:[%s2 + $0x70] sm:$0xff]
      %v306 = vld [vmem:[%s2 + $0x78] sm:$0xff]
      %308 = vset.pattern.permute.xlu0 0
      %309 = vperm.xlu0 %308, %v275
      %v310 = vpop.permute.xlu0 %309
      %313 = vset.pattern.permute.xlu0 0
      %314 = vperm.xlu0 %313, %v276
      %v315 = vpop.permute.xlu0 %314
      %318 = vset.pattern.permute.xlu0 0
      %319 = vperm.xlu0 %318, %v277
      %v320 = vpop.permute.xlu0 %319
      %323 = vset.pattern.permute.xlu0 0
      %324 = vperm.xlu0 %323, %v278
      %v325 = vpop.permute.xlu0 %324
      %328 = vset.pattern.permute.xlu0 0
      %329 = vperm.xlu0 %328, %v279
      %v330 = vpop.permute.xlu0 %329
      %333 = vset.pattern.permute.xlu0 0
      %334 = vperm.xlu0 %333, %v280
      %v335 = vpop.permute.xlu0 %334
      %338 = vset.pattern.permute.xlu0 0
      %339 = vperm.xlu0 %338, %v281
      %v340 = vpop.permute.xlu0 %339
      %343 = vset.pattern.permute.xlu0 0
      %344 = vperm.xlu0 %343, %v282
      %v345 = vpop.permute.xlu0 %344
      %348 = vset.pattern.permute.xlu0 0
      %349 = vperm.xlu0 %348, %v283
      %v350 = vpop.permute.xlu0 %349
      %353 = vset.pattern.permute.xlu0 0
      %354 = vperm.xlu0 %353, %v284
      %v355 = vpop.permute.xlu0 %354
      %358 = vset.pattern.permute.xlu0 0
      %359 = vperm.xlu0 %358, %v285
      %v360 = vpop.permute.xlu0 %359
      %363 = vset.pattern.permute.xlu0 0
      %364 = vperm.xlu0 %363, %v286
      %v365 = vpop.permute.xlu0 %364
      %368 = vset.pattern.permute.xlu0 0
      %369 = vperm.xlu0 %368, %v287
      %v370 = vpop.permute.xlu0 %369
      %373 = vset.pattern.permute.xlu0 0
      %374 = vperm.xlu0 %373, %v288
      %v375 = vpop.permute.xlu0 %374
      %378 = vset.pattern.permute.xlu0 0
      %379 = vperm.xlu0 %378, %v289
      %v380 = vpop.permute.xlu0 %379
      %383 = vset.pattern.permute.xlu0 0
      %384 = vperm.xlu0 %383, %v290
      %v385 = vpop.permute.xlu0 %384
      %v387 = vlaneseq
      %v388 = vshrl.u32 %v387, 7
      %v389 = vsub.s32 0, %v388
      %v390 = vrot.slane %v274, %v389
      %v391 = vmul.f32 %v310, %v390
      %v392 = vmul.f32 %v315, %v390
      %v393 = vmul.f32 %v320, %v390
      %v394 = vmul.f32 %v325, %v390
      %v395 = vmul.f32 %v330, %v390
      %v396 = vmul.f32 %v335, %v390
      %v397 = vmul.f32 %v340, %v390
      %v398 = vmul.f32 %v345, %v390
      %v399 = vmul.f32 %v350, %v390
      %v400 = vmul.f32 %v355, %v390
      %v401 = vmul.f32 %v360, %v390
      %v402 = vmul.f32 %v365, %v390
      %v403 = vmul.f32 %v370, %v390
      %v404 = vmul.f32 %v375, %v390
      %v405 = vmul.f32 %v380, %v390
      %v406 = vmul.f32 %v385, %v390
      %408 = vset.pattern.permute.xlu0 0
      %409 = vperm.xlu0 %408, %v291
      %v410 = vpop.permute.xlu0 %409
      %413 = vset.pattern.permute.xlu0 0
      %414 = vperm.xlu0 %413, %v292
      %v415 = vpop.permute.xlu0 %414
      %418 = vset.pattern.permute.xlu0 0
      %419 = vperm.xlu0 %418, %v293
      %v420 = vpop.permute.xlu0 %419
      %423 = vset.pattern.permute.xlu0 0
      %424 = vperm.xlu0 %423, %v294
      %v425 = vpop.permute.xlu0 %424
      %428 = vset.pattern.permute.xlu0 0
      %429 = vperm.xlu0 %428, %v295
      %v430 = vpop.permute.xlu0 %429
      %433 = vset.pattern.permute.xlu0 0
      %434 = vperm.xlu0 %433, %v296
      %v435 = vpop.permute.xlu0 %434
      %438 = vset.pattern.permute.xlu0 0
      %439 = vperm.xlu0 %438, %v297
      %v440 = vpop.permute.xlu0 %439
      %443 = vset.pattern.permute.xlu0 0
      %444 = vperm.xlu0 %443, %v298
      %v445 = vpop.permute.xlu0 %444
      %448 = vset.pattern.permute.xlu0 0
      %449 = vperm.xlu0 %448, %v299
      %v450 = vpop.permute.xlu0 %449
      %453 = vset.pattern.permute.xlu0 0
      %454 = vperm.xlu0 %453, %v300
      %v455 = vpop.permute.xlu0 %454
      %458 = vset.pattern.permute.xlu0 0
      %459 = vperm.xlu0 %458, %v301
      %v460 = vpop.permute.xlu0 %459
      %463 = vset.pattern.permute.xlu0 0
      %464 = vperm.xlu0 %463, %v302
      %v465 = vpop.permute.xlu0 %464
      %468 = vset.pattern.permute.xlu0 0
      %469 = vperm.xlu0 %468, %v303
      %v470 = vpop.permute.xlu0 %469
      %473 = vset.pattern.permute.xlu0 0
      %474 = vperm.xlu0 %473, %v304
      %v475 = vpop.permute.xlu0 %474
      %478 = vset.pattern.permute.xlu0 0
      %479 = vperm.xlu0 %478, %v305
      %v480 = vpop.permute.xlu0 %479
      %483 = vset.pattern.permute.xlu0 0
      %484 = vperm.xlu0 %483, %v306
      %v485 = vpop.permute.xlu0 %484
      %v487 = vadd.f32 %v410, %v391
      %v488 = vadd.f32 %v415, %v392
      %v489 = vadd.f32 %v420, %v393
      %v490 = vadd.f32 %v425, %v394
      %v491 = vadd.f32 %v430, %v395
      %v492 = vadd.f32 %v435, %v396
      %v493 = vadd.f32 %v440, %v397
      %v494 = vadd.f32 %v445, %v398
      %v495 = vadd.f32 %v450, %v399
      %v496 = vadd.f32 %v455, %v400
      %v497 = vadd.f32 %v460, %v401
      %v498 = vadd.f32 %v465, %v402
      %v499 = vadd.f32 %v470, %v403
      %v500 = vadd.f32 %v475, %v404
      %v501 = vadd.f32 %v480, %v405
      %v502 = vadd.f32 %v485, %v406
      %503 = vset.pattern.permute.xlu0 1
      %504 = vperm.xlu0 %503, %v275
      %v505 = vpop.permute.xlu0 %504
      %507 = vset.pattern.permute.xlu0 1
      %508 = vperm.xlu0 %507, %v276
      %v509 = vpop.permute.xlu0 %508
      %511 = vset.pattern.permute.xlu0 1
      %512 = vperm.xlu0 %511, %v277
      %v513 = vpop.permute.xlu0 %512
      %515 = vset.pattern.permute.xlu0 1
      %516 = vperm.xlu0 %515, %v278
      %v517 = vpop.permute.xlu0 %516
      %519 = vset.pattern.permute.xlu0 1
      %520 = vperm.xlu0 %519, %v279
      %v521 = vpop.permute.xlu0 %520
      %523 = vset.pattern.permute.xlu0 1
      %524 = vperm.xlu0 %523, %v280
      %v525 = vpop.permute.xlu0 %524
      %527 = vset.pattern.permute.xlu0 1
      %528 = vperm.xlu0 %527, %v281
      %v529 = vpop.permute.xlu0 %528
      %531 = vset.pattern.permute.xlu0 1
      %532 = vperm.xlu0 %531, %v282
      %v533 = vpop.permute.xlu0 %532
      %535 = vset.pattern.permute.xlu0 1
      %536 = vperm.xlu0 %535, %v283
      %v537 = vpop.permute.xlu0 %536
      %539 = vset.pattern.permute.xlu0 1
      %540 = vperm.xlu0 %539, %v284
      %v541 = vpop.permute.xlu0 %540
      %543 = vset.pattern.permute.xlu0 1
      %544 = vperm.xlu0 %543, %v285
      %v545 = vpop.permute.xlu0 %544
      %547 = vset.pattern.permute.xlu0 1
      %548 = vperm.xlu0 %547, %v286
      %v549 = vpop.permute.xlu0 %548
      %551 = vset.pattern.permute.xlu0 1
      %552 = vperm.xlu0 %551, %v287
      %v553 = vpop.permute.xlu0 %552
      %555 = vset.pattern.permute.xlu0 1
      %556 = vperm.xlu0 %555, %v288
      %v557 = vpop.permute.xlu0 %556
      %559 = vset.pattern.permute.xlu0 1
      %560 = vperm.xlu0 %559, %v289
      %v561 = vpop.permute.xlu0 %560
      %563 = vset.pattern.permute.xlu0 1
      %564 = vperm.xlu0 %563, %v290
      %v565 = vpop.permute.xlu0 %564
      %v567 = vlaneseq
      %v568 = vshrl.u32 %v567, 7
      %v569 = vsub.s32 1, %v568
      %v570 = vrot.slane %v274, %v569
      %v571 = vmul.f32 %v505, %v570
      %v572 = vmul.f32 %v509, %v570
      %v573 = vmul.f32 %v513, %v570
      %v574 = vmul.f32 %v517, %v570
      %v575 = vmul.f32 %v521, %v570
      %v576 = vmul.f32 %v525, %v570
      %v577 = vmul.f32 %v529, %v570
      %v578 = vmul.f32 %v533, %v570
      %v579 = vmul.f32 %v537, %v570
      %v580 = vmul.f32 %v541, %v570
      %v581 = vmul.f32 %v545, %v570
      %v582 = vmul.f32 %v549, %v570
      %v583 = vmul.f32 %v553, %v570
      %v584 = vmul.f32 %v557, %v570
      %v585 = vmul.f32 %v561, %v570
      %v586 = vmul.f32 %v565, %v570
      %v587 = vadd.f32 %v487, %v571
      %v588 = vadd.f32 %v488, %v572
      %v589 = vadd.f32 %v489, %v573
      %v590 = vadd.f32 %v490, %v574
      %v591 = vadd.f32 %v491, %v575
      %v592 = vadd.f32 %v492, %v576
      %v593 = vadd.f32 %v493, %v577
      %v594 = vadd.f32 %v494, %v578
      %v595 = vadd.f32 %v495, %v579
      %v596 = vadd.f32 %v496, %v580
      %v597 = vadd.f32 %v497, %v581
      %v598 = vadd.f32 %v498, %v582
      %v599 = vadd.f32 %v499, %v583
      %v600 = vadd.f32 %v500, %v584
      %v601 = vadd.f32 %v501, %v585
      %v602 = vadd.f32 %v502, %v586
      %v603 = vmax.f32 %v587, 0.0
      %v604 = vmax.f32 %v588, 0.0
      %v605 = vmax.f32 %v589, 0.0
      %v606 = vmax.f32 %v590, 0.0
      %v607 = vmax.f32 %v591, 0.0
      %v608 = vmax.f32 %v592, 0.0
      %v609 = vmax.f32 %v593, 0.0
      %v610 = vmax.f32 %v594, 0.0
      %v611 = vmax.f32 %v595, 0.0
      %v612 = vmax.f32 %v596, 0.0
      %v613 = vmax.f32 %v597, 0.0
      %v614 = vmax.f32 %v598, 0.0
      %v615 = vmax.f32 %v599, 0.0
      %v616 = vmax.f32 %v600, 0.0
      %v617 = vmax.f32 %v601, 0.0
      %v618 = vmax.f32 %v602, 0.0
      %v619 = vld [vmem:[%s3] sm:$0xff]
      %v620 = vld [vmem:[%s3 + $0x8] sm:$0xff]
      %v621 = vld [vmem:[%s3 + $0x10] sm:$0xff]
      %v622 = vld [vmem:[%s3 + $0x18] sm:$0xff]
      %v623 = vld [vmem:[%s3 + $0x20] sm:$0xff]
      %v624 = vld [vmem:[%s3 + $0x28] sm:$0xff]
      %v625 = vld [vmem:[%s3 + $0x30] sm:$0xff]
      %v626 = vld [vmem:[%s3 + $0x38] sm:$0xff]
      %v627 = vld [vmem:[%s3 + $0x40] sm:$0xff]
      %v628 = vld [vmem:[%s3 + $0x48] sm:$0xff]
      %v629 = vld [vmem:[%s3 + $0x50] sm:$0xff]
      %v630 = vld [vmem:[%s3 + $0x58] sm:$0xff]
      %v631 = vld [vmem:[%s3 + $0x60] sm:$0xff]
      %v632 = vld [vmem:[%s3 + $0x68] sm:$0xff]
      %v633 = vld [vmem:[%s3 + $0x70] sm:$0xff]
      %v634 = vld [vmem:[%s3 + $0x78] sm:$0xff]
      %v635 = vld [vmem:[%s4] sm:$0xff]
      %v636 = vld [vmem:[%s4 + $0x8] sm:$0xff]
      %v637 = vld [vmem:[%s4 + $0x10] sm:$0xff]
      %v638 = vld [vmem:[%s4 + $0x18] sm:$0xff]
      %v639 = vld [vmem:[%s4 + $0x20] sm:$0xff]
      %v640 = vld [vmem:[%s4 + $0x28] sm:$0xff]
      %v641 = vld [vmem:[%s4 + $0x30] sm:$0xff]
      %v642 = vld [vmem:[%s4 + $0x38] sm:$0xff]
      %v643 = vld [vmem:[%s4 + $0x40] sm:$0xff]
      %v644 = vld [vmem:[%s4 + $0x48] sm:$0xff]
      %v645 = vld [vmem:[%s4 + $0x50] sm:$0xff]
      %v646 = vld [vmem:[%s4 + $0x58] sm:$0xff]
      %v647 = vld [vmem:[%s4 + $0x60] sm:$0xff]
      %v648 = vld [vmem:[%s4 + $0x68] sm:$0xff]
      %v649 = vld [vmem:[%s4 + $0x70] sm:$0xff]
      %v650 = vld [vmem:[%s4 + $0x78] sm:$0xff]
      %652 = vset.pattern.permute.xlu0 0
      %653 = vperm.xlu0 %652, %v635
      %v654 = vpop.permute.xlu0 %653
      %657 = vset.pattern.permute.xlu0 0
      %658 = vperm.xlu0 %657, %v636
      %v659 = vpop.permute.xlu0 %658
      %662 = vset.pattern.permute.xlu0 0
      %663 = vperm.xlu0 %662, %v637
      %v664 = vpop.permute.xlu0 %663
      %667 = vset.pattern.permute.xlu0 0
      %668 = vperm.xlu0 %667, %v638
      %v669 = vpop.permute.xlu0 %668
      %672 = vset.pattern.permute.xlu0 0
      %673 = vperm.xlu0 %672, %v639
      %v674 = vpop.permute.xlu0 %673
      %677 = vset.pattern.permute.xlu0 0
      %678 = vperm.xlu0 %677, %v640
      %v679 = vpop.permute.xlu0 %678
      %682 = vset.pattern.permute.xlu0 0
      %683 = vperm.xlu0 %682, %v641
      %v684 = vpop.permute.xlu0 %683
      %687 = vset.pattern.permute.xlu0 0
      %688 = vperm.xlu0 %687, %v642
      %v689 = vpop.permute.xlu0 %688
      %692 = vset.pattern.permute.xlu0 0
      %693 = vperm.xlu0 %692, %v643
      %v694 = vpop.permute.xlu0 %693
      %697 = vset.pattern.permute.xlu0 0
      %698 = vperm.xlu0 %697, %v644
      %v699 = vpop.permute.xlu0 %698
      %702 = vset.pattern.permute.xlu0 0
      %703 = vperm.xlu0 %702, %v645
      %v704 = vpop.permute.xlu0 %703
      %707 = vset.pattern.permute.xlu0 0
      %708 = vperm.xlu0 %707, %v646
      %v709 = vpop.permute.xlu0 %708
      %712 = vset.pattern.permute.xlu0 0
      %713 = vperm.xlu0 %712, %v647
      %v714 = vpop.permute.xlu0 %713
      %717 = vset.pattern.permute.xlu0 0
      %718 = vperm.xlu0 %717, %v648
      %v719 = vpop.permute.xlu0 %718
      %722 = vset.pattern.permute.xlu0 0
      %723 = vperm.xlu0 %722, %v649
      %v724 = vpop.permute.xlu0 %723
      %727 = vset.pattern.permute.xlu0 0
      %728 = vperm.xlu0 %727, %v650
      %v729 = vpop.permute.xlu0 %728
      %731 = vmatprep.subr.mxu0 0.0
      %732 = vmatpush1.msra.mxu0 %v618
      %733 = vmatprep.subr.mxu0 0.0
      %734 = vmatpush1.msra.mxu0 %v617
      %735 = vmatprep.subr.mxu0 0.0
      %736 = vmatpush1.msra.mxu0 %v616
      %737 = vmatprep.subr.mxu0 0.0
      %738 = vmatpush1.msra.mxu0 %v615
      %739 = vmatprep.subr.mxu0 0.0
      %740 = vmatpush1.msra.mxu0 %v614
      %741 = vmatprep.subr.mxu0 0.0
      %742 = vmatpush1.msra.mxu0 %v613
      %743 = vmatprep.subr.mxu0 0.0
      %744 = vmatpush1.msra.mxu0 %v612
      %745 = vmatprep.subr.mxu0 0.0
      %746 = vmatpush1.msra.mxu0 %v611
      %747 = vmatprep.subr.mxu0 0.0
      %748 = vmatpush1.msra.mxu0 %v610
      %749 = vmatprep.subr.mxu0 0.0
      %750 = vmatpush1.msra.mxu0 %v609
      %751 = vmatprep.subr.mxu0 0.0
      %752 = vmatpush1.msra.mxu0 %v608
      %753 = vmatprep.subr.mxu0 0.0
      %754 = vmatpush1.msra.mxu0 %v607
      %755 = vmatprep.subr.mxu0 0.0
      %756 = vmatpush1.msra.mxu0 %v606
      %757 = vmatprep.subr.mxu0 0.0
      %758 = vmatpush1.msra.mxu0 %v605
      %759 = vmatprep.subr.mxu0 0.0
      %760 = vmatpush1.msra.mxu0 %v604
      %761 = vmatprep.subr.mxu0 0.0
      %762 = vmatpush1.msra.mxu0 %v603
      %763 = vmatprep.subr.mxu0 0.0
      %764 = vmatpush2.msra.mxu0 0.0
      %765 = vmatprep.subr.mxu0 0.0
      %766 = vmatpush2.msra.mxu0 0.0
      %767 = vmatprep.subr.mxu0 0.0
      %768 = vmatpush2.msra.mxu0 0.0
      %769 = vmatprep.subr.mxu0 0.0
      %770 = vmatpush2.msra.mxu0 0.0
      %771 = vmatprep.subr.mxu0 0.0
      %772 = vmatpush2.msra.mxu0 0.0
      %773 = vmatprep.subr.mxu0 0.0
      %774 = vmatpush2.msra.mxu0 0.0
      %775 = vmatprep.subr.mxu0 0.0
      %776 = vmatpush2.msra.mxu0 0.0
      %777 = vmatprep.subr.mxu0 0.0
      %778 = vmatpush2.msra.mxu0 0.0
      %779 = vmatprep.subr.mxu0 0.0
      %780 = vmatpush2.msra.mxu0 0.0
      %781 = vmatprep.subr.mxu0 0.0
      %782 = vmatpush2.msra.mxu0 0.0
      %783 = vmatprep.subr.mxu0 0.0
      %784 = vmatpush2.msra.mxu0 0.0
      %785 = vmatprep.subr.mxu0 0.0
      %786 = vmatpush2.msra.mxu0 0.0
      %787 = vmatprep.subr.mxu0 0.0
      %788 = vmatpush2.msra.mxu0 0.0
      %789 = vmatprep.subr.mxu0 0.0
      %790 = vmatpush2.msra.mxu0 0.0
      %791 = vmatprep.subr.mxu0 0.0
      %792 = vmatpush2.msra.mxu0 0.0
      %793 = vmatprep.subr.mxu0 0.0
      %794 = vmatpush2.msra.mxu0 0.0
      %795 = vmatprep.mubr.f32.mxu0 0.0
      %796 = vmatmul.mubr.f32.gmra.mxu0 %v619
      %v797 = vpop.f32.mrf.mxu0
      %v798 = vadd.f32 %v654, %v797
      %v799 = vpop.f32.mrf.mxu0
      %800 = vmatprep.mubr.f32.mxu0 0.0
      %801 = vmatmul.mubr.f32.gmra.mxu0 %v620
      %v802 = vpop.f32.mrf.mxu0
      %v803 = vadd.f32 %v659, %v802
      %v804 = vpop.f32.mrf.mxu0
      %805 = vmatprep.mubr.f32.mxu0 0.0
      %806 = vmatmul.mubr.f32.gmra.mxu0 %v621
      %v807 = vpop.f32.mrf.mxu0
      %v808 = vadd.f32 %v664, %v807
      %v809 = vpop.f32.mrf.mxu0
      %810 = vmatprep.mubr.f32.mxu0 0.0
      %811 = vmatmul.mubr.f32.gmra.mxu0 %v622
      %v812 = vpop.f32.mrf.mxu0
      %v813 = vadd.f32 %v669, %v812
      %v814 = vpop.f32.mrf.mxu0
      %815 = vmatprep.mubr.f32.mxu0 0.0
      %816 = vmatmul.mubr.f32.gmra.mxu0 %v623
      %v817 = vpop.f32.mrf.mxu0
      %v818 = vadd.f32 %v674, %v817
      %v819 = vpop.f32.mrf.mxu0
      %820 = vmatprep.mubr.f32.mxu0 0.0
      %821 = vmatmul.mubr.f32.gmra.mxu0 %v624
      %v822 = vpop.f32.mrf.mxu0
      %v823 = vadd.f32 %v679, %v822
      %v824 = vpop.f32.mrf.mxu0
      %825 = vmatprep.mubr.f32.mxu0 0.0
      %826 = vmatmul.mubr.f32.gmra.mxu0 %v625
      %v827 = vpop.f32.mrf.mxu0
      %v828 = vadd.f32 %v684, %v827
      %v829 = vpop.f32.mrf.mxu0
      %830 = vmatprep.mubr.f32.mxu0 0.0
      %831 = vmatmul.mubr.f32.gmra.mxu0 %v626
      %v832 = vpop.f32.mrf.mxu0
      %v833 = vadd.f32 %v689, %v832
      %v834 = vpop.f32.mrf.mxu0
      %835 = vmatprep.mubr.f32.mxu0 0.0
      %836 = vmatmul.mubr.f32.gmra.mxu0 %v627
      %v837 = vpop.f32.mrf.mxu0
      %v838 = vadd.f32 %v694, %v837
      %v839 = vpop.f32.mrf.mxu0
      %840 = vmatprep.mubr.f32.mxu0 0.0
      %841 = vmatmul.mubr.f32.gmra.mxu0 %v628
      %v842 = vpop.f32.mrf.mxu0
      %v843 = vadd.f32 %v699, %v842
      %v844 = vpop.f32.mrf.mxu0
      %845 = vmatprep.mubr.f32.mxu0 0.0
      %846 = vmatmul.mubr.f32.gmra.mxu0 %v629
      %v847 = vpop.f32.mrf.mxu0
      %v848 = vadd.f32 %v704, %v847
      %v849 = vpop.f32.mrf.mxu0
      %850 = vmatprep.mubr.f32.mxu0 0.0
      %851 = vmatmul.mubr.f32.gmra.mxu0 %v630
      %v852 = vpop.f32.mrf.mxu0
      %v853 = vadd.f32 %v709, %v852
      %v854 = vpop.f32.mrf.mxu0
      %855 = vmatprep.mubr.f32.mxu0 0.0
      %856 = vmatmul.mubr.f32.gmra.mxu0 %v631
      %v857 = vpop.f32.mrf.mxu0
      %v858 = vadd.f32 %v714, %v857
      %v859 = vpop.f32.mrf.mxu0
      %860 = vmatprep.mubr.f32.mxu0 0.0
      %861 = vmatmul.mubr.f32.gmra.mxu0 %v632
      %v862 = vpop.f32.mrf.mxu0
      %v863 = vadd.f32 %v719, %v862
      %v864 = vpop.f32.mrf.mxu0
      %865 = vmatprep.mubr.f32.mxu0 0.0
      %866 = vmatmul.mubr.f32.gmra.mxu0 %v633
      %v867 = vpop.f32.mrf.mxu0
      %v868 = vadd.f32 %v724, %v867
      %v869 = vpop.f32.mrf.mxu0
      %870 = vmatprep.mubr.f32.mxu0 0.0
      %871 = vmatmul.mubr.f32.gmra.mxu0 %v634
      %v872 = vpop.f32.mrf.mxu0
      %v873 = vadd.f32 %v729, %v872
      %v874 = vpop.f32.mrf.mxu0
      %875 = vdwg.mxu0
      %v876 = vmax.f32 %v798, 0.0
      %v877 = vmax.f32 %v803, 0.0
      %v878 = vmax.f32 %v808, 0.0
      %v879 = vmax.f32 %v813, 0.0
      %v880 = vmax.f32 %v818, 0.0
      %v881 = vmax.f32 %v823, 0.0
      %v882 = vmax.f32 %v828, 0.0
      %v883 = vmax.f32 %v833, 0.0
      %v884 = vmax.f32 %v838, 0.0
      %v885 = vmax.f32 %v843, 0.0
      %v886 = vmax.f32 %v848, 0.0
      %v887 = vmax.f32 %v853, 0.0
      %v888 = vmax.f32 %v858, 0.0
      %v889 = vmax.f32 %v863, 0.0
      %v890 = vmax.f32 %v868, 0.0
      %v891 = vmax.f32 %v873, 0.0
      %v892 = vld [vmem:[%s5] sm:$0x3]
      %v893 = vld [vmem:[%s6] sm:$0x3]
      %895 = vset.pattern.permute.xlu0 0
      %896 = vperm.xlu0 %895, %v893
      %v897 = vpop.permute.xlu0 %896
      %899 = vmatprep.subr.mxu0 0.0
      %900 = vmatpush1.msra.mxu0 %v891
      %901 = vmatprep.subr.mxu0 0.0
      %902 = vmatpush1.msra.mxu0 %v890
      %903 = vmatprep.subr.mxu0 0.0
      %904 = vmatpush1.msra.mxu0 %v889
      %905 = vmatprep.subr.mxu0 0.0
      %906 = vmatpush1.msra.mxu0 %v888
      %907 = vmatprep.subr.mxu0 0.0
      %908 = vmatpush1.msra.mxu0 %v887
      %909 = vmatprep.subr.mxu0 0.0
      %910 = vmatpush1.msra.mxu0 %v886
      %911 = vmatprep.subr.mxu0 0.0
      %912 = vmatpush1.msra.mxu0 %v885
      %913 = vmatprep.subr.mxu0 0.0
      %914 = vmatpush1.msra.mxu0 %v884
      %915 = vmatprep.subr.mxu0 0.0
      %916 = vmatpush1.msra.mxu0 %v883
      %917 = vmatprep.subr.mxu0 0.0
      %918 = vmatpush1.msra.mxu0 %v882
      %919 = vmatprep.subr.mxu0 0.0
      %920 = vmatpush1.msra.mxu0 %v881
      %921 = vmatprep.subr.mxu0 0.0
      %922 = vmatpush1.msra.mxu0 %v880
      %923 = vmatprep.subr.mxu0 0.0
      %924 = vmatpush1.msra.mxu0 %v879
      %925 = vmatprep.subr.mxu0 0.0
      %926 = vmatpush1.msra.mxu0 %v878
      %927 = vmatprep.subr.mxu0 0.0
      %928 = vmatpush1.msra.mxu0 %v877
      %929 = vmatprep.subr.mxu0 0.0
      %930 = vmatpush1.msra.mxu0 %v876
      %931 = vmatprep.subr.mxu0 0.0
      %932 = vmatpush2.msra.mxu0 0.0
      %933 = vmatprep.subr.mxu0 0.0
      %934 = vmatpush2.msra.mxu0 0.0
      %935 = vmatprep.subr.mxu0 0.0
      %936 = vmatpush2.msra.mxu0 0.0
      %937 = vmatprep.subr.mxu0 0.0
      %938 = vmatpush2.msra.mxu0 0.0
      %939 = vmatprep.subr.mxu0 0.0
      %940 = vmatpush2.msra.mxu0 0.0
      %941 = vmatprep.subr.mxu0 0.0
      %942 = vmatpush2.msra.mxu0 0.0
      %943 = vmatprep.subr.mxu0 0.0
      %944 = vmatpush2.msra.mxu0 0.0
      %945 = vmatprep.subr.mxu0 0.0
      %946 = vmatpush2.msra.mxu0 0.0
      %947 = vmatprep.subr.mxu0 0.0
      %948 = vmatpush2.msra.mxu0 0.0
      %949 = vmatprep.subr.mxu0 0.0
      %950 = vmatpush2.msra.mxu0 0.0
      %951 = vmatprep.subr.mxu0 0.0
      %952 = vmatpush2.msra.mxu0 0.0
      %953 = vmatprep.subr.mxu0 0.0
      %954 = vmatpush2.msra.mxu0 0.0
      %955 = vmatprep.subr.mxu0 0.0
      %956 = vmatpush2.msra.mxu0 0.0
      %957 = vmatprep.subr.mxu0 0.0
      %958 = vmatpush2.msra.mxu0 0.0
      %959 = vmatprep.subr.mxu0 0.0
      %960 = vmatpush2.msra.mxu0 0.0
      %961 = vmatprep.subr.mxu0 0.0
      %962 = vmatpush2.msra.mxu0 0.0
      %963 = vmatprep.mubr.f32.mxu0 0.0
      %964 = vmatmul.mubr.f32.gmra.mxu0 %v892
      %v965 = vpop.f32.mrf.mxu0
      %v966 = vadd.f32 %v897, %v965
      %v967 = vpop.f32.mrf.mxu0
      %968 = vdwg.mxu0
      %969 = vst [vmem:[%s273] sm:$0x3] %v966
      %p970 = scmp.lt.s32.totalorder %s18, 1
      %s971 = scalar_select %p970, %s18, 1
      %s972 = smul.addr %s971, 2
      %s973 = scalar_lea.vmem %s7, %s972
      // Predicated region
      $region49: #{st_forward.1} parent=47 // pred_check
        %p974 = pneg %p188
      $region50: #{st_forward.1} parent=47 // pred_check_branch
        %976 = sbr.rel (%p974) target = $region52
      $region51: #{st_forward.1} parent=47 // pred_region
        _
      $region52: #{st_forward.1} parent=47 // pred_fallthru
        _
    $region48: #{st_forward.1} parent=5 // pred_fallthru
      _
    %p977 = scmp.le.s32.totalorder 2, %s13
    // Predicated region
    $region53: #{st_forward.1} parent=5 // pred_check
      %p978 = pneg %p977
    $region54: #{st_forward.1} parent=5 // pred_check_branch
      %980 = sbr.rel (%p978) target = $region56
    $region55: #{st_forward.1} parent=5 // pred_region
      %s981 = ssub.s32 %s13, 2
      // Predicated region
      $region57: #{st_forward.1} parent=55 // pred_check
        %p982 = pneg %p194
      $region58: #{st_forward.1} parent=55 // pred_check_branch
        %984 = sbr.rel (%p982) target = $region60
      $region59: #{st_forward.1} parent=55 // pred_region
        %p985 = scmp.lt.s32.totalorder %s19, 1
        %s986 = scalar_select %p985, %s19, 1
        %s987 = smul.addr %s986, 2
        %s988 = scalar_lea.vmem %s7, %s987
      $region60: #{st_forward.1} parent=55 // pred_fallthru
        _
    $region56: #{st_forward.1} parent=5 // pred_fallthru
      _
  $region6: #{st_forward.1} parent=0 // loop_footer
    %s17 = sadd.s32 1, %s13
  $region7: #{st_forward.1} parent=0 // loop_footer_branch
    %12 = sbr.rel target = $region3
  $region8: #{st_forward.1} parent=0 // loop_exit
    _

</llo_original>
